<compile_context>
chip_gen: v7x
topology: tpu7x:2x2x1
jax: 0.10.0
libtpu: 0.0.40
codegen_flags: <defaults>
</compile_context>

<pallas_src>
import functools

import jax
import jax.numpy as jnp
from jax.experimental import pallas as pl
from jax.experimental.pallas import tpu as pltpu


def _round_up(v, m):
    return ((v + m - 1) // m) * m


# ---------------------------------------------------------------------------
# Fused kernel: y = x @ [W_mu | W_logvar] + [b_mu | b_logvar]
#   x_ref: (tm, K)   w_ref: (K, Npacked)   b_ref: (1, Npacked)
#   y_ref: (tm, Npacked)   -- single lane-dense (multiple-of-128) store.
# ---------------------------------------------------------------------------
def _diag_gaussian_kernel(x_ref, w_ref, b_ref, y_ref):
    y = jnp.dot(x_ref[...], w_ref[...], preferred_element_type=jnp.float32)
    y_ref[...] = (y + b_ref[...]).astype(y_ref.dtype)


# ---------------------------------------------------------------------------
# Parameter init (matches nn.Linear default init) + one-time packing
# ---------------------------------------------------------------------------
def init_diagonal_gaussian_params(key, hidden_dim, latent_dim):
    params = {}
    scale = 1.0 / jnp.sqrt(hidden_dim)
    for name in ("fc_mu", "fc_logvar"):
        key, kw, kb = jax.random.split(key, 3)
        # stored as (in, out) so forward is x @ W
        w = jax.random.uniform(kw, (hidden_dim, latent_dim), jnp.float32, -scale, scale)
        b = jax.random.uniform(kb, (latent_dim,), jnp.float32, -scale, scale)
        params[name] = (w, b)
    return params


def pack_params(params, hidden_dim, latent_dim):
    """Pack both heads into one matrix: W (hidden, Npacked), b (1, Npacked),
    with Npacked = round_up(2*latent, 128).  Done once, not per call."""
    w_mu, b_mu = params["fc_mu"]
    w_lv, b_lv = params["fc_logvar"]
    n_packed = _round_up(2 * latent_dim, 128)
    w = jnp.zeros((hidden_dim, n_packed), jnp.float32)
    w = w.at[:, :latent_dim].set(w_mu)
    w = w.at[:, latent_dim:2 * latent_dim].set(w_lv)
    b = jnp.zeros((1, n_packed), jnp.float32)
    b = b.at[0, :latent_dim].set(b_mu)
    b = b.at[0, latent_dim:2 * latent_dim].set(b_lv)
    return w, b


# ---------------------------------------------------------------------------
# Forward: x (B, hidden_dim) -> (mu (B, latent_dim), logvar (B, latent_dim))
# ---------------------------------------------------------------------------
@functools.partial(jax.jit, static_argnames=("latent_dim",))
def diagonal_gaussian_forward(x, w_packed, b_packed, *, latent_dim):
    x = x.astype(jnp.float32)
    B, K = x.shape
    n_packed = w_packed.shape[1]

    # Batch tiling: no padding of x — rely on the masked partial last block.
    # For B > 8 make sure the grid has >= 2 steps (v7x dual-TensorCore).
    TM = 512
    if B <= 8:
        tm = B                                    # single full-dim block
    else:
        tm = min(TM, _round_up(pl.cdiv(B, 2), 8))
    grid_m = pl.cdiv(B, tm)

    # Cost estimate with the real packed (not per-head-padded) sizes.
    flops = 2 * B * K * n_packed
    bytes_accessed = 4 * (B * K + K * n_packed + n_packed + B * n_packed)

    # Explicit VMEM budget (double-buffered x/y + resident packed weights/bias).
    vmem_need = 4 * (2 * tm * K + 2 * tm * n_packed + 2 * K * n_packed + 2 * n_packed)
    vmem_limit = int(min(max(2 * vmem_need, 4 << 20), 32 << 20))

    y = pl.pallas_call(
        _diag_gaussian_kernel,
        out_shape=jax.ShapeDtypeStruct((B, n_packed), jnp.float32),
        grid_spec=pltpu.PrefetchScalarGridSpec(
            num_scalar_prefetch=0,
            grid=(grid_m,),
            in_specs=[
                pl.BlockSpec((tm, K), lambda i: (i, 0)),          # activations
                pl.BlockSpec((K, n_packed), lambda i: (0, 0)),    # packed weights (resident)
                pl.BlockSpec((1, n_packed), lambda i: (0, 0)),    # packed bias (resident)
            ],
            out_specs=pl.BlockSpec((tm, n_packed), lambda i: (i, 0)),
        ),
        compiler_params=pltpu.CompilerParams(
            dimension_semantics=("parallel",),
            vmem_limit_bytes=vmem_limit,
        ),
        cost_estimate=pl.CostEstimate(
            flops=flops, transcendentals=0, bytes_accessed=bytes_accessed
        ),
    )(x, w_packed, b_packed)

    # Cheap column slices outside the kernel (mu | logvar | zero-pad).
    mu = y[:, :latent_dim]
    logvar = y[:, latent_dim:2 * latent_dim]
    return mu, logvar


# ---------------------------------------------------------------------------
# Pure-JAX reference for a correctness check
# ---------------------------------------------------------------------------
def diagonal_gaussian_forward_ref(params, x):
    w_mu, b_mu = params["fc_mu"]
    w_lv, b_lv = params["fc_logvar"]
    return x @ w_mu + b_mu, x @ w_lv + b_lv


if __name__ == "__main__":
    # Module defaults: hidden_dim=128; small latent_dim=32.
    hidden_dim, latent_dim = 128, 32

    key = jax.random.PRNGKey(0)
    pkey, xkey1, xkey2 = jax.random.split(key, 3)

    params = init_diagonal_gaussian_params(pkey, hidden_dim, latent_dim)
    w_packed, b_packed = pack_params(params, hidden_dim, latent_dim)

    # Test both the tiny-batch (single full-dim block) and the multi-step grid
    # with a masked partial last block (B=37 -> tm=24, grid=2, 13 valid rows).
    for batch, xkey in ((2, xkey1), (37, xkey2)):
        x = jax.random.normal(xkey, (batch, hidden_dim), jnp.float32)

        mu, logvar = diagonal_gaussian_forward(
            x, w_packed, b_packed, latent_dim=latent_dim
        )
        mu = jax.block_until_ready(mu)
        logvar = jax.block_until_ready(logvar)

        mu_ref, logvar_ref = diagonal_gaussian_forward_ref(params, x)

        assert mu.shape == (batch, latent_dim), mu.shape
        assert logvar.shape == (batch, latent_dim), logvar.shape
        assert jnp.allclose(mu, mu_ref, atol=1e-5, rtol=1e-5), "mu mismatch vs reference"
        assert jnp.allclose(logvar, logvar_ref, atol=1e-5, rtol=1e-5), "logvar mismatch vs reference"

    print("KERNEL_OK")
</pallas_src>

<mosaic_0001>
module attributes {stable_mosaic.version = 11 : i64} {
  func.func @_diag_gaussian_kernel(%arg0: i32, %arg1: memref<2x128xf32, #tpu.memory_space<vmem>>, %arg2: memref<128x128xf32, #tpu.memory_space<vmem>>, %arg3: memref<1x128xf32, #tpu.memory_space<vmem>>, %arg4: memref<2x128xf32, #tpu.memory_space<vmem>>) attributes {dimension_semantics = [#tpu.dimension_semantics<parallel>], iteration_bounds = array<i64: 1>, scalar_prefetch = 0 : i64, scratch_operands = 0 : i64, tpu.core_type = #tpu.core_type<tc>, window_params = [{transform_indices = @transform_0, window_bounds = array<i64: 2, 128>}, {pipeline_mode = #tpu.pipeline_mode<synchronous>, transform_indices = @transform_1, window_bounds = array<i64: 128, 128>}, {pipeline_mode = #tpu.pipeline_mode<synchronous>, transform_indices = @transform_2, window_bounds = array<i64: 1, 128>}, {transform_indices = @transform_3, window_bounds = array<i64: 2, 128>}]} {
    %c0 = arith.constant 0 : index
    %c0_0 = arith.constant 0 : index
    %0 = vector.load %arg1[%c0, %c0_0] : memref<2x128xf32, #tpu.memory_space<vmem>>, vector<2x128xf32>
    %c0_1 = arith.constant 0 : index
    %c0_2 = arith.constant 0 : index
    %1 = vector.load %arg2[%c0_1, %c0_2] : memref<128x128xf32, #tpu.memory_space<vmem>>, vector<128x128xf32>
    %cst = arith.constant dense<0.000000e+00> : vector<2x128xf32>
    %2 = tpu.matmul %0, %1, %cst {dimension_numbers = #tpu.dot_dimension_numbers<[1], [0], [0], [1], [0, 0, 1, 1], [], []>} : vector<2x128xf32>, vector<128x128xf32>, vector<2x128xf32> -> vector<2x128xf32>
    %c0_3 = arith.constant 0 : index
    %c0_4 = arith.constant 0 : index
    %3 = vector.load %arg3[%c0_3, %c0_4] : memref<1x128xf32, #tpu.memory_space<vmem>>, vector<1x128xf32>
    %4 = vector.broadcast %3 : vector<1x128xf32> to vector<2x128xf32>
    %5 = arith.addf %2, %4 : vector<2x128xf32>
    %c0_5 = arith.constant 0 : index
    %c0_6 = arith.constant 0 : index
    %6 = vector.load %arg4[%c0_5, %c0_6] : memref<2x128xf32, #tpu.memory_space<vmem>>, vector<2x128xf32>
    tpu.vector_store %arg4[%c0_5, %c0_6], %5 {strides = array<i32>} : memref<2x128xf32, #tpu.memory_space<vmem>>, vector<2x128xf32>,
    return
  }
  func.func @transform_0(%arg0: i32) -> (i32, i32) {
    %c0_i32 = arith.constant 0 : i32
    %c0_i32_0 = arith.constant 0 : i32
    return %arg0, %c0_i32 : i32, i32
  }
  func.func @transform_1(%arg0: i32) -> (i32, i32) {
    %c0_i32 = arith.constant 0 : i32
    %c0_i32_0 = arith.constant 0 : i32
    %c0_i32_1 = arith.constant 0 : i32
    return %c0_i32, %c0_i32_0 : i32, i32
  }
  func.func @transform_2(%arg0: i32) -> (i32, i32) {
    %c0_i32 = arith.constant 0 : i32
    %c0_i32_0 = arith.constant 0 : i32
    %c0_i32_1 = arith.constant 0 : i32
    return %c0_i32, %c0_i32_0 : i32, i32
  }
  func.func @transform_3(%arg0: i32) -> (i32, i32) {
    %c0_i32 = arith.constant 0 : i32
    %c0_i32_0 = arith.constant 0 : i32
    return %arg0, %c0_i32 : i32, i32
  }
}

</mosaic_0001>

<llo_original>
// kernel: diagonal_gaussian_forward.1
$region0: #{diagonal_gaussian_forward.1}
  #allocation0 [shape = 'u32[]', space=smem, size = 0x4, offset = 0x4, fixed_abs, tag = 'smem constant byte address 0x4 - core index']
  #allocation1 [shape = 'u32[144,128]{1,0:T(1,128)}', space=vmem, size = 0x12000, scoped, tag = 'internal scratch']
  %s0 = inlined_call_operand.hbm [shape: f32[2,128], index: 0, kind: input, shape index: {}]
  %s1 = inlined_call_operand.hbm [shape: f32[128,128], index: 1, kind: input, shape index: {}]
  %s2 = inlined_call_operand.vmem [shape: f32[1,128], index: 2, kind: input, shape index: {}]
  %s3 = inlined_call_operand.vmem [shape: f32[2,128], index: 3, kind: output, shape index: {}]
  %s4 = sld [smem:[#allocation0]]
  $region30: #{diagonal_gaussian_forward.1} parent=0
    _
  %s6 = ssub.s32 1, %s4
  %s7 = scalar_select 0, %s6, %s4
  $region1: #{diagonal_gaussian_forward.1} parent=0
    #allocation2 [shape = 'u8[1024]{0}', space=vmem, size = 0x400, scoped, tag = 'input window, operand 0, single buffered']
    #allocation3 [shape = 's32[1]{0}', space=sflag, size = 0x4, scoped, tag = 'scoped memory for diagonal_gaussian_forward.1']
    #allocation4 [shape = 'u8[65536]{0}', space=vmem, size = 0x10000, scoped, tag = 'input window, operand 1, single buffered']
    #allocation5 [shape = 's32[1]{0}', space=sflag, size = 0x4, scoped, tag = 'scoped memory for diagonal_gaussian_forward.1']
    %8 = vsyncpa [#allocation3], 0
    %9 = vsyncpa [#allocation5], 0
    // Predicated region
    $region2: #{diagonal_gaussian_forward.1} parent=1 // pred_check
      _
    $region3: #{diagonal_gaussian_forward.1} parent=1 // pred_check_branch
      %11 = sbr.rel (0) target = $region5
    $region4: #{diagonal_gaussian_forward.1} parent=1 // pred_region
      %s13 = ssub.s32 32, 32
      %14 = vsyncadd [#allocation3], %s13
      %s16 = sshll.u32 [#allocation2], 4
      %s17 = int_to_ptr.vmem [resolvable:$true] %s16
      %19 = dma.hbm_to_vmem [thread:$0]  %s0, 32, %s17, [#allocation3]
    $region5: #{diagonal_gaussian_forward.1} parent=1 // pred_fallthru
      _
    // Predicated region
    $region6: #{diagonal_gaussian_forward.1} parent=1 // pred_check
      _
    $region7: #{diagonal_gaussian_forward.1} parent=1 // pred_check_branch
      %21 = sbr.rel (0) target = $region9
    $region8: #{diagonal_gaussian_forward.1} parent=1 // pred_region
      %s23 = ssub.s32 2048, 2048
      %24 = vsyncadd [#allocation5], %s23
      %s25 = sshll.u32 [#allocation4], 4
      %s26 = int_to_ptr.vmem [resolvable:$true] %s25
      %31 = dma.hbm_to_vmem [thread:$0]  %s1, 2048, %s26, [#allocation5], 128, 128, 8
    $region9: #{diagonal_gaussian_forward.1} parent=1 // pred_fallthru
      _
    // Predicated region
    $region10: #{diagonal_gaussian_forward.1} parent=1 // pred_check
      _
    $region11: #{diagonal_gaussian_forward.1} parent=1 // pred_check_branch
      %33 = sbr.rel (0) target = $region13
    $region12: #{diagonal_gaussian_forward.1} parent=1 // pred_region
      _
    $region13: #{diagonal_gaussian_forward.1} parent=1 // pred_fallthru
      _
    // Predicated region
    $region14: #{diagonal_gaussian_forward.1} parent=1 // pred_check
      _
    $region15: #{diagonal_gaussian_forward.1} parent=1 // pred_check_branch
      %35 = sbr.rel (0) target = $region17
    $region16: #{diagonal_gaussian_forward.1} parent=1 // pred_region
      %36 = dma.done [#allocation3], 32
    $region17: #{diagonal_gaussian_forward.1} parent=1 // pred_fallthru
      _
    // Predicated region
    $region18: #{diagonal_gaussian_forward.1} parent=1 // pred_check
      _
    $region19: #{diagonal_gaussian_forward.1} parent=1 // pred_check_branch
      %38 = sbr.rel (0) target = $region21
    $region20: #{diagonal_gaussian_forward.1} parent=1 // pred_region
      %39 = dma.done [#allocation5], 2048
    $region21: #{diagonal_gaussian_forward.1} parent=1 // pred_fallthru
      _
    %v40 = vld [vmem:[#allocation2] sm:$0x3]
    %v41 = vld [vmem:[#allocation4] sm:$0xff]
    %v42 = vld [vmem:[#allocation4 + $0x8] sm:$0xff]
    %v43 = vld [vmem:[#allocation4 + $0x10] sm:$0xff]
    %v44 = vld [vmem:[#allocation4 + $0x18] sm:$0xff]
    %v45 = vld [vmem:[#allocation4 + $0x20] sm:$0xff]
    %v46 = vld [vmem:[#allocation4 + $0x28] sm:$0xff]
    %v47 = vld [vmem:[#allocation4 + $0x30] sm:$0xff]
    %v48 = vld [vmem:[#allocation4 + $0x38] sm:$0xff]
    %v49 = vld [vmem:[#allocation4 + $0x40] sm:$0xff]
    %v50 = vld [vmem:[#allocation4 + $0x48] sm:$0xff]
    %v51 = vld [vmem:[#allocation4 + $0x50] sm:$0xff]
    %v52 = vld [vmem:[#allocation4 + $0x58] sm:$0xff]
    %v53 = vld [vmem:[#allocation4 + $0x60] sm:$0xff]
    %v54 = vld [vmem:[#allocation4 + $0x68] sm:$0xff]
    %v55 = vld [vmem:[#allocation4 + $0x70] sm:$0xff]
    %v56 = vld [vmem:[#allocation4 + $0x78] sm:$0xff]
    %v57 = vld [vmem:[%s2] sm:$0x1]
    %v59 = vlaneseq
    %v60 = vshrl.u32 %v59, 7
    %v61 = vsub.s32 0, %v60
    %v62 = vrot.slane %v57, %v61
    %64 = vmatprep.subr.mxu0 0.0
    %65 = vmatpush1.msra.mxu0 %v41
    %66 = vmatprep.subr.mxu0 0.0
    %67 = vmatpush1.msra.mxu0 %v42
    %68 = vmatprep.subr.mxu0 0.0
    %69 = vmatpush1.msra.mxu0 %v43
    %70 = vmatprep.subr.mxu0 0.0
    %71 = vmatpush1.msra.mxu0 %v44
    %72 = vmatprep.subr.mxu0 0.0
    %73 = vmatpush1.msra.mxu0 %v45
    %74 = vmatprep.subr.mxu0 0.0
    %75 = vmatpush1.msra.mxu0 %v46
    %76 = vmatprep.subr.mxu0 0.0
    %77 = vmatpush1.msra.mxu0 %v47
    %78 = vmatprep.subr.mxu0 0.0
    %79 = vmatpush1.msra.mxu0 %v48
    %80 = vmatprep.subr.mxu0 0.0
    %81 = vmatpush1.msra.mxu0 %v49
    %82 = vmatprep.subr.mxu0 0.0
    %83 = vmatpush1.msra.mxu0 %v50
    %84 = vmatprep.subr.mxu0 0.0
    %85 = vmatpush1.msra.mxu0 %v51
    %86 = vmatprep.subr.mxu0 0.0
    %87 = vmatpush1.msra.mxu0 %v52
    %88 = vmatprep.subr.mxu0 0.0
    %89 = vmatpush1.msra.mxu0 %v53
    %90 = vmatprep.subr.mxu0 0.0
    %91 = vmatpush1.msra.mxu0 %v54
    %92 = vmatprep.subr.mxu0 0.0
    %93 = vmatpush1.msra.mxu0 %v55
    %94 = vmatprep.subr.mxu0 0.0
    %95 = vmatpush1.msra.mxu0 %v56
    %96 = vmatprep.subr.mxu0 0.0
    %97 = vmatpush1.msra.mxu0 0.0
    %98 = vmatprep.subr.mxu0 0.0
    %99 = vmatpush1.msra.mxu0 0.0
    %100 = vmatprep.subr.mxu0 0.0
    %101 = vmatpush1.msra.mxu0 0.0
    %102 = vmatprep.subr.mxu0 0.0
    %103 = vmatpush1.msra.mxu0 0.0
    %104 = vmatprep.subr.mxu0 0.0
    %105 = vmatpush1.msra.mxu0 0.0
    %106 = vmatprep.subr.mxu0 0.0
    %107 = vmatpush1.msra.mxu0 0.0
    %108 = vmatprep.subr.mxu0 0.0
    %109 = vmatpush1.msra.mxu0 0.0
    %110 = vmatprep.subr.mxu0 0.0
    %111 = vmatpush1.msra.mxu0 0.0
    %112 = vmatprep.subr.mxu0 0.0
    %113 = vmatpush1.msra.mxu0 0.0
    %114 = vmatprep.subr.mxu0 0.0
    %115 = vmatpush1.msra.mxu0 0.0
    %116 = vmatprep.subr.mxu0 0.0
    %117 = vmatpush1.msra.mxu0 0.0
    %118 = vmatprep.subr.mxu0 0.0
    %119 = vmatpush1.msra.mxu0 0.0
    %120 = vmatprep.subr.mxu0 0.0
    %121 = vmatpush1.msra.mxu0 0.0
    %122 = vmatprep.subr.mxu0 0.0
    %123 = vmatpush1.msra.mxu0 0.0
    %124 = vmatprep.subr.mxu0 0.0
    %125 = vmatpush1.msra.mxu0 0.0
    %126 = vmatprep.subr.mxu0 0.0
    %127 = vmatpush1.msra.mxu0 0.0
    %128 = vmatprep.mubr.f32.mxu0 0.0
    %129 = vmatmul.mubr.f32.gmra.mrb[0].mxu0 %v40
    %v130 = vpop.f32.mrb[0].mxu0
    %v131 = vadd.f32 %v62, %v130
    %v132 = vpop.f32.mrb[0].mxu0
    %133 = vdwg.mxu0
    %134 = vst [vmem:[%s3] sm:$0x3] %v131
    // Predicated region
    $region22: #{diagonal_gaussian_forward.1} parent=1 // pred_check
      _
    $region23: #{diagonal_gaussian_forward.1} parent=1 // pred_check_branch
      %136 = sbr.rel (0) target = $region25
    $region24: #{diagonal_gaussian_forward.1} parent=1 // pred_region
      _
    $region25: #{diagonal_gaussian_forward.1} parent=1 // pred_fallthru
      _
    // Predicated region
    $region26: #{diagonal_gaussian_forward.1} parent=1 // pred_check
      _
    $region27: #{diagonal_gaussian_forward.1} parent=1 // pred_check_branch
      %138 = sbr.rel (0) target = $region29
    $region28: #{diagonal_gaussian_forward.1} parent=1 // pred_region
      _
    $region29: #{diagonal_gaussian_forward.1} parent=1 // pred_fallthru
      _
    %139 = vsyncpa [#allocation3], 1
    %140 = vsyncpa [#allocation5], 1

</llo_original>
